<compile_context>
chip_gen: v5e
topology: v5e:2x2
jax: 0.10.0
libtpu: 0.0.40
codegen_flags: <defaults>
</compile_context>

<pallas_src>
import jax
import jax.numpy as jnp
from jax.experimental import pallas as pl
from jax.experimental.pallas import tpu as pltpu

WDT = jnp.bfloat16                       # matmul-operand dtype; accumulation is f32
_VMEM_LIMIT = 48 * 1024 * 1024           # explicit scoped-VMEM budget (safe on v7x)


# ---------------------------------------------------------------------------
# Shared math — used inside the Pallas kernels AND by the pure-JAX reference,
# so the correctness check tracks the kernel math exactly (same bf16 casts).
# ---------------------------------------------------------------------------
def _prepare_math(enc_rows_f32, w_e16, b_attn):
    """rows of enc [R,H] f32 -> (enc bf16 [R,H], (enc @ W_e + b) bf16 [R,H])."""
    enc16 = enc_rows_f32.astype(WDT)
    proj = (jnp.dot(enc16, w_e16, preferred_element_type=jnp.float32)
            + b_attn).astype(WDT)
    return enc16, proj


def _scores_chunk(proj_e16, proj_h, v16):
    """proj_e16 [B,C,H] bf16, proj_h [B,H] f32, v16 [H,1] bf16 -> scores [B,C] f32.

    Single flat [B*C,H] @ [H,1] matmul (correct MXU orientation, one RHS push)
    instead of B independent q=1 batched matmuls."""
    B, C, H = proj_e16.shape
    energy = jnp.tanh(proj_e16.astype(jnp.float32) + proj_h[:, None, :])   # [B,C,H]
    sc = jnp.dot(energy.reshape(B * C, H).astype(WDT), v16,
                 preferred_element_type=jnp.float32)                        # [B*C,1]
    return sc.reshape(B, C)


def _softmax_context(scores, enc16):
    """scores [B,S] f32 (lane-dense softmax over S), enc16 [B,S,H] bf16 -> ctx [B,H] f32."""
    B, S, H = enc16.shape
    m = jnp.max(scores, axis=-1, keepdims=True)
    e = jnp.exp(scores - m)
    attn = (e / jnp.sum(e, axis=-1, keepdims=True)).astype(WDT)             # [B,S]
    ctx = jnp.einsum("bqs,bsh->bqh", attn.reshape(B, 1, S), enc16,
                     preferred_element_type=jnp.float32)                    # [B,1,H]
    return ctx.reshape(B, H)


def _lstm_step(emb, ctx16, hidden, cell, w_l0_e, w_l0_c, w_x, w_hh, b_lstm):
    """Single stacked-LSTM step (PyTorch gate order i,f,g,o).

    Per-layer SPLIT gate matmuls (no [B,2H] concat copies); bf16 operands,
    f32 accumulation / activations."""
    L, B, H = hidden.shape
    hs, cs = [], []
    x = None
    for l in range(L):
        if l == 0:
            gates = (jnp.dot(emb.astype(WDT), w_l0_e, preferred_element_type=jnp.float32)
                     + jnp.dot(ctx16, w_l0_c, preferred_element_type=jnp.float32)
                     + jnp.dot(hidden[0].astype(WDT), w_hh[0],
                               preferred_element_type=jnp.float32)
                     + b_lstm[0:1, :])
        else:
            gates = (jnp.dot(x.astype(WDT), w_x[l - 1],
                             preferred_element_type=jnp.float32)
                     + jnp.dot(hidden[l].astype(WDT), w_hh[l],
                               preferred_element_type=jnp.float32)
                     + b_lstm[l:l + 1, :])
        i_g = jax.nn.sigmoid(gates[:, 0 * H:1 * H])
        f_g = jax.nn.sigmoid(gates[:, 1 * H:2 * H])
        g_g = jnp.tanh(gates[:, 2 * H:3 * H])
        o_g = jax.nn.sigmoid(gates[:, 3 * H:4 * H])
        c_new = f_g * cell[l] + i_g * g_g
        h_new = o_g * jnp.tanh(c_new)
        hs.append(h_new)
        cs.append(c_new)
        x = h_new                      # inter-layer dropout == identity (eval)
    return x, hs, cs


def _logits_tile(hc16, w_tile16, b_tile):
    """[h;ctx] [B,2H] bf16 @ W_out tile [2H,tv] bf16 + b [1,tv] -> [B,tv] f32."""
    return jnp.dot(hc16, w_tile16, preferred_element_type=jnp.float32) + b_tile


# ---------------------------------------------------------------------------
# Pallas kernels
# ---------------------------------------------------------------------------
def _prepare_kernel(enc_ref, w_ref, b_ref, enc16_ref, proj_ref):
    enc16, proj = _prepare_math(enc_ref[...], w_ref[...], b_ref[...])
    enc16_ref[...] = enc16
    proj_ref[...] = proj


def _decoder_step_kernel(
    emb_ref,        # [B, E]    f32   embedded tokens (dropout == identity, eval)
    hidden_ref,     # [L, B, H] f32
    cell_ref,       # [L, B, H] f32
    enc_ref,        # [B, S, H] bf16  batch-major encoder outputs (hoisted)
    proj_e_ref,     # [B, S, H] bf16  precomputed enc @ W_e + b (hoisted)
    w_attn_h_ref,   # [H, H]    bf16
    v_attn_ref,     # [H, 1]    bf16
    w_l0_e_ref,     # [E, 4H]   bf16  layer-0 embedding rows
    w_l0_c_ref,     # [H, 4H]   bf16  layer-0 context rows
    w_x_ref,        # [max(L-1,1), H, 4H] bf16  layers>0 input rows
    w_hh_ref,       # [L, H, 4H] bf16 hidden->gate weights
    b_lstm_ref,     # [L, 4H]   f32   (b_ih + b_hh)
    w_out_ref,      # [2H, tv]  bf16  streamed W_out tile
    b_out_ref,      # [1, tv]   f32   streamed b_out tile
    logits_ref,     # out: [B, tv]
    new_h_ref,      # out: [L, B, H]  (constant block index -> VMEM-resident)
    new_c_ref,      # out: [L, B, H]
    hc_scratch,     # scratch: [B, 2H] bf16   persistent [h_out; ctx]
    scores_scratch,  # scratch: [B, S]  f32    attention scores
):
    B, S, H = enc_ref.shape
    L = hidden_ref.shape[0]

    # ---- attention + LSTM only once, on the first vocab tile --------------
    @pl.when(pl.program_id(0) == 0)
    def _():
        hidden = hidden_ref[...]
        cell = cell_ref[...]

        # Bahdanau attention with the PRE-update top hidden state.
        proj_h = jnp.dot(hidden[L - 1].astype(WDT), w_attn_h_ref[...],
                         preferred_element_type=jnp.float32)               # [B,H]

        # Chunk over S: the f32 energy tensor is never materialized in full.
        SC = 128 if S % 128 == 0 else (64 if S % 64 == 0 else S)
        nchunks = S // SC

        @pl.loop(0, nchunks)
        def _(c):
            off = pl.multiple_of(c * SC, SC)
            scores_scratch[:, pl.ds(off, SC)] = _scores_chunk(
                proj_e_ref[:, pl.ds(off, SC), :], proj_h, v_attn_ref[...])

        ctx = _softmax_context(scores_scratch[...], enc_ref[...])           # [B,H]
        ctx16 = ctx.astype(WDT)

        # Stacked LSTM step (split gate matmuls, no concat copies).
        h_top, hs, cs = _lstm_step(
            emb_ref[...], ctx16, hidden, cell,
            w_l0_e_ref[...], w_l0_c_ref[...], w_x_ref[...], w_hh_ref[...],
            b_lstm_ref[...])
        for l in range(L):
            new_h_ref[l] = hs[l]
            new_c_ref[l] = cs[l]

        # Persist [h_out; ctx] in VMEM for every vocab tile of this step.
        hc_scratch[:, 0:H] = h_top.astype(WDT)
        hc_scratch[:, H:2 * H] = ctx16

    # ---- vocab projection tile: every grid step (W_out streamed over V) ---
    logits_ref[...] = _logits_tile(hc_scratch[...], w_out_ref[...], b_out_ref[...])


# ---------------------------------------------------------------------------
# Wrappers
# ---------------------------------------------------------------------------
def prepare_sequence(encoder_outputs, p, *, tr=512):
    """Per-SEQUENCE hoist: call ONCE, reuse (enc16, proj_e) for every decode step."""
    S, B, H = encoder_outputs.shape
    enc_bm = jnp.swapaxes(encoder_outputs, 0, 1)                 # [B,S,H] (hoisted)
    rows = B * S
    enc_flat = enc_bm.reshape(rows, H)
    tr = min(tr, rows)
    nr = pl.cdiv(rows, tr)

    enc16, proj_e = pl.pallas_call(
        _prepare_kernel,
        out_shape=(jax.ShapeDtypeStruct((rows, H), WDT),
                   jax.ShapeDtypeStruct((rows, H), WDT)),
        grid=(nr,),
        in_specs=[
            pl.BlockSpec((tr, H), lambda i: (i, 0)),
            pl.BlockSpec((H, H), lambda i: (0, 0)),
            pl.BlockSpec((1, H), lambda i: (0, 0)),
        ],
        out_specs=(
            pl.BlockSpec((tr, H), lambda i: (i, 0)),
            pl.BlockSpec((tr, H), lambda i: (i, 0)),
        ),
        compiler_params=pltpu.CompilerParams(
            dimension_semantics=("parallel",),
            vmem_limit_bytes=_VMEM_LIMIT),
    )(enc_flat, p["w_attn_e"], p["b_attn"])
    return enc16.reshape(B, S, H), proj_e.reshape(B, S, H)


def decoder_step(input_ids, hidden, cell, enc16, proj_e, p, *, tv=512):
    """One decode step. input_ids [B] int32; enc16/proj_e from prepare_sequence."""
    L, B, H = hidden.shape
    E = p["embedding"].shape[1]
    V = p["b_out"].shape[1]
    S = enc16.shape[1]
    Lx = p["w_x"].shape[0]

    # glue: data-dependent embedding gather stays an XLA op (eval: no dropout).
    embedded = p["embedding"][input_ids]                          # [B,E] f32

    tv = min(tv, V)
    if V % tv != 0:
        # TODO(synk): pad V to a multiple of tv for ragged vocab sizes.
        tv = V
    nv = pl.cdiv(V, tv)

    logits, new_h, new_c = pl.pallas_call(
        _decoder_step_kernel,
        out_shape=(
            jax.ShapeDtypeStruct((B, V), jnp.float32),
            jax.ShapeDtypeStruct((L, B, H), jnp.float32),
            jax.ShapeDtypeStruct((L, B, H), jnp.float32),
        ),
        grid=(nv,),
        in_specs=[
            pl.BlockSpec((B, E), lambda j: (0, 0)),
            pl.BlockSpec((L, B, H), lambda j: (0, 0, 0)),
            pl.BlockSpec((L, B, H), lambda j: (0, 0, 0)),
            pl.BlockSpec((B, S, H), lambda j: (0, 0, 0)),
            pl.BlockSpec((B, S, H), lambda j: (0, 0, 0)),
            pl.BlockSpec((H, H), lambda j: (0, 0)),
            pl.BlockSpec((H, 1), lambda j: (0, 0)),
            pl.BlockSpec((E, 4 * H), lambda j: (0, 0)),
            pl.BlockSpec((H, 4 * H), lambda j: (0, 0)),
            pl.BlockSpec((Lx, H, 4 * H), lambda j: (0, 0, 0)),
            pl.BlockSpec((L, H, 4 * H), lambda j: (0, 0, 0)),
            pl.BlockSpec((L, 4 * H), lambda j: (0, 0)),
            pl.BlockSpec((2 * H, tv), lambda j: (0, j)),           # streamed W_out
            pl.BlockSpec((1, tv), lambda j: (0, j)),               # streamed b_out
        ],
        out_specs=(
            pl.BlockSpec((B, tv), lambda j: (0, j)),               # lane-dense logits
            pl.BlockSpec((L, B, H), lambda j: (0, 0, 0)),
            pl.BlockSpec((L, B, H), lambda j: (0, 0, 0)),
        ),
        scratch_shapes=[
            pltpu.VMEM((B, 2 * H), WDT),                           # [h_out; ctx]
            pltpu.VMEM((B, S), jnp.float32),                       # attention scores
        ],
        compiler_params=pltpu.CompilerParams(
            dimension_semantics=("arbitrary",),                    # step 0 feeds later tiles
            vmem_limit_bytes=_VMEM_LIMIT),
    )(embedded, hidden, cell, enc16, proj_e,
      p["w_attn_h"], p["v_attn"],
      p["w_l0_e"], p["w_l0_c"], p["w_x"], p["w_hh"], p["b_lstm"],
      p["w_out"], p["b_out"])

    return logits, (new_h, new_c)


# ---------------------------------------------------------------------------
# Pure-JAX reference (mirrors the kernel math, same bf16 casts) + param packing
# ---------------------------------------------------------------------------
def _reference_forward(input_ids, hidden, cell, encoder_outputs, p):
    L, B, H = hidden.shape
    S = encoder_outputs.shape[0]
    emb = p["embedding"][input_ids]
    enc_bm = jnp.swapaxes(encoder_outputs, 0, 1)
    enc16_flat, proj_flat = _prepare_math(enc_bm.reshape(B * S, H),
                                          p["w_attn_e"], p["b_attn"])
    enc16 = enc16_flat.reshape(B, S, H)
    proj_e = proj_flat.reshape(B, S, H)
    proj_h = jnp.dot(hidden[-1].astype(WDT), p["w_attn_h"],
                     preferred_element_type=jnp.float32)
    scores = _scores_chunk(proj_e, proj_h, p["v_attn"])
    ctx = _softmax_context(scores, enc16)
    ctx16 = ctx.astype(WDT)
    h_top, hs, cs = _lstm_step(emb, ctx16, hidden, cell,
                               p["w_l0_e"], p["w_l0_c"], p["w_x"], p["w_hh"],
                               p["b_lstm"])
    hc16 = jnp.concatenate([h_top.astype(WDT), ctx16], axis=-1)
    logits = _logits_tile(hc16, p["w_out"], p["b_out"])
    return logits, (jnp.stack(hs), jnp.stack(cs))


def _init_raw_params(key, output_dim, emb_dim, hidden_dim, n_layers):
    ks = jax.random.split(key, 12)
    s = 0.1
    return {
        "embedding": s * jax.random.normal(ks[0], (output_dim, emb_dim), jnp.float32),
        "w_attn_h":  s * jax.random.normal(ks[1], (hidden_dim, hidden_dim), jnp.float32),
        "w_attn_e":  s * jax.random.normal(ks[2], (hidden_dim, hidden_dim), jnp.float32),
        "b_attn":    s * jax.random.normal(ks[3], (1, hidden_dim), jnp.float32),
        "v_attn":    s * jax.random.normal(ks[4], (1, hidden_dim), jnp.float32),
        "w_ih":      s * jax.random.normal(
            ks[5], (n_layers, emb_dim + hidden_dim, 4 * hidden_dim), jnp.float32),
        "w_hh":      s * jax.random.normal(
            ks[6], (n_layers, hidden_dim, 4 * hidden_dim), jnp.float32),
        "b_ih":      s * jax.random.normal(ks[7], (n_layers, 4 * hidden_dim), jnp.float32),
        "b_hh":      s * jax.random.normal(ks[8], (n_layers, 4 * hidden_dim), jnp.float32),
        "w_out":     s * jax.random.normal(ks[9], (2 * hidden_dim, output_dim), jnp.float32),
        "b_out":     s * jax.random.normal(ks[10], (1, output_dim), jnp.float32),
    }


def _pack_params(raw, emb_dim, hidden_dim, n_layers):
    """Repack weights: split gate matmuls, [2H,V] output weight, bf16 storage."""
    E, H, L = emb_dim, hidden_dim, n_layers
    w_ih, w_hh = raw["w_ih"], raw["w_hh"]
    if L > 1:
        w_x = jnp.stack([w_ih[l, :H, :] for l in range(1, L)]).astype(WDT)  # [L-1,H,4H]
    else:
        w_x = jnp.zeros((1, H, 4 * H), WDT)                                 # unused dummy
    return {
        "embedding": raw["embedding"],                                       # f32 (gathered)
        "w_attn_h": raw["w_attn_h"].astype(WDT),
        "w_attn_e": raw["w_attn_e"].astype(WDT),
        "b_attn": raw["b_attn"],                                             # [1,H] f32
        "v_attn": raw["v_attn"].reshape(H, 1).astype(WDT),                   # [H,1] bf16
        "w_l0_e": w_ih[0, :E, :].astype(WDT),                                # [E,4H]
        "w_l0_c": w_ih[0, E:E + H, :].astype(WDT),                           # [H,4H]
        "w_x": w_x,
        "w_hh": w_hh.astype(WDT),                                            # [L,H,4H]
        "b_lstm": raw["b_ih"] + raw["b_hh"],                                 # [L,4H] f32
        "w_out": raw["w_out"].astype(WDT),                                   # [2H,V]
        "b_out": raw["b_out"],                                               # [1,V] f32
    }


if __name__ == "__main__":
    # Lane/sublane-dense small shapes: V,H,S multiples of 128; B multiple of 8.
    OUTPUT_DIM = 1024   # vocab size V -> two 512-wide vocab tiles (exercise grid)
    EMB_DIM = 128
    HIDDEN_DIM = 128
    N_LAYERS = 2
    BATCH = 8
    SRC_LEN = 256       # two 128-wide attention chunks (exercise the S loop)

    key = jax.random.PRNGKey(0)
    k_par, k_in, k_h, k_c, k_enc = jax.random.split(key, 5)

    raw = _init_raw_params(k_par, OUTPUT_DIM, EMB_DIM, HIDDEN_DIM, N_LAYERS)
    params = _pack_params(raw, EMB_DIM, HIDDEN_DIM, N_LAYERS)

    input_ids = jax.random.randint(k_in, (BATCH,), 0, OUTPUT_DIM, jnp.int32)
    hidden = 0.1 * jax.random.normal(k_h, (N_LAYERS, BATCH, HIDDEN_DIM), jnp.float32)
    cell = 0.1 * jax.random.normal(k_c, (N_LAYERS, BATCH, HIDDEN_DIM), jnp.float32)
    encoder_outputs = 0.1 * jax.random.normal(
        k_enc, (SRC_LEN, BATCH, HIDDEN_DIM), jnp.float32)

    prep_fn = jax.jit(lambda enc: prepare_sequence(enc, params))
    step_fn = jax.jit(lambda ids, h, c, e16, pe: decoder_step(ids, h, c, e16, pe, params))

    # Hoisted ONCE per sequence.
    enc16, proj_e = prep_fn(encoder_outputs)

    # Two decode steps reusing the hoisted enc16/proj_e (recurrence fed back).
    h, c = hidden, cell
    logits = None
    for _ in range(2):
        logits, (h, c) = step_fn(input_ids, h, c, enc16, proj_e)
    jax.block_until_ready((logits, h, c))

    # Pure-JAX reference, same two steps.
    rh, rc = hidden, cell
    ref_logits = None
    for _ in range(2):
        ref_logits, (rh, rc) = _reference_forward(input_ids, rh, rc,
                                                  encoder_outputs, params)

    assert logits.shape == (BATCH, OUTPUT_DIM)
    assert h.shape == (N_LAYERS, BATCH, HIDDEN_DIM)
    assert c.shape == (N_LAYERS, BATCH, HIDDEN_DIM)
    assert jnp.allclose(logits, ref_logits, atol=3e-3, rtol=3e-3)
    assert jnp.allclose(h, rh, atol=3e-3, rtol=3e-3)
    assert jnp.allclose(c, rc, atol=3e-3, rtol=3e-3)

    print("KERNEL_OK")
</pallas_src>

<mosaic_0001>
module attributes {stable_mosaic.version = 11 : i64} {
  func.func @_prepare_kernel(%arg0: i32, %arg1: memref<512x128xf32, #tpu.memory_space<vmem>>, %arg2: memref<128x128xbf16, #tpu.memory_space<vmem>>, %arg3: memref<1x128xf32, #tpu.memory_space<vmem>>, %arg4: memref<512x128xbf16, #tpu.memory_space<vmem>>, %arg5: memref<512x128xbf16, #tpu.memory_space<vmem>>) attributes {dimension_semantics = [#tpu.dimension_semantics<parallel>], iteration_bounds = array<i64: 4>, scalar_prefetch = 0 : i64, scratch_operands = 0 : i64, tpu.core_type = #tpu.core_type<tc>, window_params = [{transform_indices = @transform_0, window_bounds = array<i64: 512, 128>}, {pipeline_mode = #tpu.pipeline_mode<synchronous>, transform_indices = @transform_1, window_bounds = array<i64: 128, 128>}, {pipeline_mode = #tpu.pipeline_mode<synchronous>, transform_indices = @transform_2, window_bounds = array<i64: 1, 128>}, {transform_indices = @transform_3, window_bounds = array<i64: 512, 128>}, {transform_indices = @transform_4, window_bounds = array<i64: 512, 128>}]} {
    %c0 = arith.constant 0 : index
    %c0_0 = arith.constant 0 : index
    %0 = vector.load %arg1[%c0, %c0_0] : memref<512x128xf32, #tpu.memory_space<vmem>>, vector<512x128xf32>
    %c0_1 = arith.constant 0 : index
    %c0_2 = arith.constant 0 : index
    %1 = vector.load %arg2[%c0_1, %c0_2] : memref<128x128xbf16, #tpu.memory_space<vmem>>, vector<128x128xbf16>
    %c0_3 = arith.constant 0 : index
    %c0_4 = arith.constant 0 : index
    %2 = vector.load %arg3[%c0_3, %c0_4] : memref<1x128xf32, #tpu.memory_space<vmem>>, vector<1x128xf32>
    %3 = arith.truncf %0 : vector<512x128xf32> to vector<512x128xbf16>
    %cst = arith.constant dense<0.000000e+00> : vector<512x128xf32>
    %4 = tpu.matmul %3, %1, %cst {dimension_numbers = #tpu.dot_dimension_numbers<[1], [0], [0], [1], [0, 0, 1, 1], [], []>} : vector<512x128xbf16>, vector<128x128xbf16>, vector<512x128xf32> -> vector<512x128xf32>
    %5 = vector.broadcast %2 : vector<1x128xf32> to vector<512x128xf32>
    %6 = arith.addf %4, %5 : vector<512x128xf32>
    %7 = arith.truncf %6 : vector<512x128xf32> to vector<512x128xbf16>
    %c0_5 = arith.constant 0 : index
    %c0_6 = arith.constant 0 : index
    %8 = vector.load %arg4[%c0_5, %c0_6] : memref<512x128xbf16, #tpu.memory_space<vmem>>, vector<512x128xbf16>
    tpu.vector_store %arg4[%c0_5, %c0_6], %3 {strides = array<i32>} : memref<512x128xbf16, #tpu.memory_space<vmem>>, vector<512x128xbf16>,
    %c0_7 = arith.constant 0 : index
    %c0_8 = arith.constant 0 : index
    %9 = vector.load %arg5[%c0_7, %c0_8] : memref<512x128xbf16, #tpu.memory_space<vmem>>, vector<512x128xbf16>
    tpu.vector_store %arg5[%c0_7, %c0_8], %7 {strides = array<i32>} : memref<512x128xbf16, #tpu.memory_space<vmem>>, vector<512x128xbf16>,
    return
  }
  func.func @transform_0(%arg0: i32) -> (i32, i32) {
    %c0_i32 = arith.constant 0 : i32
    %c0_i32_0 = arith.constant 0 : i32
    return %arg0, %c0_i32 : i32, i32
  }
  func.func @transform_1(%arg0: i32) -> (i32, i32) {
    %c0_i32 = arith.constant 0 : i32
    %c0_i32_0 = arith.constant 0 : i32
    %c0_i32_1 = arith.constant 0 : i32
    return %c0_i32, %c0_i32_0 : i32, i32
  }
  func.func @transform_2(%arg0: i32) -> (i32, i32) {
    %c0_i32 = arith.constant 0 : i32
    %c0_i32_0 = arith.constant 0 : i32
    %c0_i32_1 = arith.constant 0 : i32
    return %c0_i32, %c0_i32_0 : i32, i32
  }
  func.func @transform_3(%arg0: i32) -> (i32, i32) {
    %c0_i32 = arith.constant 0 : i32
    %c0_i32_0 = arith.constant 0 : i32
    return %arg0, %c0_i32 : i32, i32
  }
  func.func @transform_4(%arg0: i32) -> (i32, i32) {
    %c0_i32 = arith.constant 0 : i32
    %c0_i32_0 = arith.constant 0 : i32
    return %arg0, %c0_i32 : i32, i32
  }
}

</mosaic_0001>

<llo_original>
// kernel: _lambda_.1
$region0: #{_lambda_.1}
  #allocation0 [shape = 'u32[]', space=smem, size = 0x4, offset = 0x4, fixed_abs, tag = 'smem constant byte address 0x4 - core index']
  #allocation1 [shape = 'u32[72,128]{1,0:T(1,128)}', space=vmem, size = 0x9000, scoped, tag = 'internal scratch']
  %s0 = inlined_call_operand.vmem [shape: f32[2048,128], index: 0, kind: input, shape index: {}]
  %s1 = inlined_call_operand.vmem [shape: bf16[128,128], index: 1, kind: input, shape index: {}]
  %s2 = inlined_call_operand.vmem [shape: f32[1,128], index: 2, kind: input, shape index: {}]
  %s3 = inlined_call_operand.hbm [shape: bf16[2048,128], index: 3, kind: output, shape index: {0}]
  %s4 = inlined_call_operand.hbm [shape: bf16[2048,128], index: 4, kind: output, shape index: {1}]
  %5 = xla_tuple %s3, %s4
  %s6 = sld [smem:[#allocation0]]
  $region53: #{_lambda_.1} parent=0
    _
  %s8 = ssub.s32 1, %s6
  %s9 = scalar_select 0, %s8, %s6
  $region1: #{_lambda_.1} parent=0
    #allocation2 [shape = 'u8[262144]{0}', space=vmem, size = 0x40000, scoped, tag = 'output window, operand 0']
    #allocation3 [shape = 's32[2]{0}', space=sflag, size = 0x8, scoped, tag = 'scoped memory for _lambda_.1']
    #allocation4 [shape = 'u8[262144]{0}', space=vmem, size = 0x40000, scoped, tag = 'output window, operand 1']
    #allocation5 [shape = 's32[2]{0}', space=sflag, size = 0x8, scoped, tag = 'scoped memory for _lambda_.1']
    %10 = vsyncpa [#allocation3], 0
    %s11 = scalar_lea.sflag [#allocation3], 1
    %12 = vsyncpa %s11, 0
    %13 = vsyncpa [#allocation5], 0
    %s14 = scalar_lea.sflag [#allocation5], 1
    %15 = vsyncpa %s14, 0
    loop: start=0, step=1, limit=6
    $region2: #{_lambda_.1} parent=1 // loop_pre_header
      _
    $region3: #{_lambda_.1} parent=1 // loop_header
      %s17 = sphi 0, %s21
      %p18 = scmp.ge.s32.totalorder %s17, 6
      %s27 = sphi 0, %s29
      %s30 = sphi 0, %s27
      %s31 = sphi 0, %s30
      %s47 = sphi 0, %s31
      %s51 = sphi 0, %s51
      %s53 = sphi 0, %s51
      %s54 = sphi 0, %s53
      %s68 = sphi 0, %s54
      %s72 = sphi 0, %s72
      %s74 = sphi 0, %s72
      %s75 = sphi 0, %s74
      %s89 = sphi 0, %s75
      %s95 = sphi 0, %s97
      %s98 = sphi 0, %s95
      %s99 = sphi 0, %s98
      %s115 = sphi 0, %s99
      %s121 = sphi 0, %s123
      %s124 = sphi 0, %s121
      %s125 = sphi 0, %s124
      %s141 = sphi 0, %s125
    $region4: #{_lambda_.1} parent=1 // loop_header_branch
      %20 = sbr.rel (%p18) target = $region8
    $region5: #{_lambda_.1} parent=1 // loop_body
      %s22 = ssub.s32 %s17, 1
      %s23 = ssub.s32 %s17, 2
      %s24 = sadd.s32 %s17, 1
      %s25 = ssub.s32 %s17, %s24
      %p26 = scmp.eq.s32.totalorder %s25, 0
      %s28 = sadd.s32 %s27, 1
      %s29 = scalar_select %p26, %s27, %s28
      %p32 = pneg %p26
      %p33 = scmp.eq.s32.totalorder %s17, 3
      %p34 = por %p32, %p33
      %p35 = scmp.ne.s32.totalorder %s27, %s30
      %p36 = scmp.eq.s32.totalorder %s17, 0
      %p37 = por %p35, %p36
      %p38 = scmp.ne.s32.totalorder %s27, %s30
      %p39 = scmp.eq.s32.totalorder %s22, 3
      %p40 = por %p38, %p39
      %p41 = scmp.ne.s32.totalorder %s30, %s31
      %p42 = scmp.eq.s32.totalorder %s22, 0
      %p43 = por %p41, %p42
      %p44 = scmp.ne.s32.totalorder %s30, %s31
      %p45 = scmp.eq.s32.totalorder %s23, 3
      %p46 = por %p44, %p45
      %p48 = scmp.ne.s32.totalorder %s31, %s47
      %p49 = scmp.eq.s32.totalorder %s23, 0
      %p50 = por %p48, %p49
      %s52 = sadd.s32 %s51, 1
      %p55 = scmp.eq.s32.totalorder %s17, 3
      %p56 = scmp.ne.s32.totalorder %s51, %s53
      %p57 = scmp.eq.s32.totalorder %s17, 0
      %p58 = por %p56, %p57
      %p59 = scmp.ne.s32.totalorder %s51, %s53
      %p60 = scmp.eq.s32.totalorder %s22, 3
      %p61 = por %p59, %p60
      %p62 = scmp.ne.s32.totalorder %s53, %s54
      %p63 = scmp.eq.s32.totalorder %s22, 0
      %p64 = por %p62, %p63
      %p65 = scmp.ne.s32.totalorder %s53, %s54
      %p66 = scmp.eq.s32.totalorder %s23, 3
      %p67 = por %p65, %p66
      %p69 = scmp.ne.s32.totalorder %s54, %s68
      %p70 = scmp.eq.s32.totalorder %s23, 0
      %p71 = por %p69, %p70
      %s73 = sadd.s32 %s72, 1
      %p76 = scmp.eq.s32.totalorder %s17, 3
      %p77 = scmp.ne.s32.totalorder %s72, %s74
      %p78 = scmp.eq.s32.totalorder %s17, 0
      %p79 = por %p77, %p78
      %p80 = scmp.ne.s32.totalorder %s72, %s74
      %p81 = scmp.eq.s32.totalorder %s22, 3
      %p82 = por %p80, %p81
      %p83 = scmp.ne.s32.totalorder %s74, %s75
      %p84 = scmp.eq.s32.totalorder %s22, 0
      %p85 = por %p83, %p84
      %p86 = scmp.ne.s32.totalorder %s74, %s75
      %p87 = scmp.eq.s32.totalorder %s23, 3
      %p88 = por %p86, %p87
      %p90 = scmp.ne.s32.totalorder %s75, %s89
      %p91 = scmp.eq.s32.totalorder %s23, 0
      %p92 = por %p90, %p91
      %s93 = ssub.s32 %s17, %s24
      %p94 = scmp.eq.s32.totalorder %s93, 0
      %s96 = sadd.s32 %s95, 1
      %s97 = scalar_select %p94, %s95, %s96
      %p100 = pneg %p94
      %p101 = scmp.eq.s32.totalorder %s17, 3
      %p102 = por %p100, %p101
      %p103 = scmp.ne.s32.totalorder %s95, %s98
      %p104 = scmp.eq.s32.totalorder %s17, 0
      %p105 = por %p103, %p104
      %p106 = scmp.ne.s32.totalorder %s95, %s98
      %p107 = scmp.eq.s32.totalorder %s22, 3
      %p108 = por %p106, %p107
      %p109 = scmp.ne.s32.totalorder %s98, %s99
      %p110 = scmp.eq.s32.totalorder %s22, 0
      %p111 = por %p109, %p110
      %p112 = scmp.ne.s32.totalorder %s98, %s99
      %p113 = scmp.eq.s32.totalorder %s23, 3
      %p114 = por %p112, %p113
      %p116 = scmp.ne.s32.totalorder %s99, %s115
      %p117 = scmp.eq.s32.totalorder %s23, 0
      %p118 = por %p116, %p117
      %s119 = ssub.s32 %s17, %s24
      %p120 = scmp.eq.s32.totalorder %s119, 0
      %s122 = sadd.s32 %s121, 1
      %s123 = scalar_select %p120, %s121, %s122
      %p126 = pneg %p120
      %p127 = scmp.eq.s32.totalorder %s17, 3
      %p128 = por %p126, %p127
      %p129 = scmp.ne.s32.totalorder %s121, %s124
      %p130 = scmp.eq.s32.totalorder %s17, 0
      %p131 = por %p129, %p130
      %p132 = scmp.ne.s32.totalorder %s121, %s124
      %p133 = scmp.eq.s32.totalorder %s22, 3
      %p134 = por %p132, %p133
      %p135 = scmp.ne.s32.totalorder %s124, %s125
      %p136 = scmp.eq.s32.totalorder %s22, 0
      %p137 = por %p135, %p136
      %p138 = scmp.ne.s32.totalorder %s124, %s125
      %p139 = scmp.eq.s32.totalorder %s23, 3
      %p140 = por %p138, %p139
      %p142 = scmp.ne.s32.totalorder %s125, %s141
      %p143 = scmp.eq.s32.totalorder %s23, 0
      %p144 = por %p142, %p143
      %p145 = scmp.le.s32.totalorder 1, %s17
      %p146 = scmp.lt.s32.totalorder %s17, 5
      %p147 = pnand %p145, %p146
      %p148 = pneg %p147
      // Predicated region
      $region9: #{_lambda_.1} parent=5 // pred_check
        _
      $region10: #{_lambda_.1} parent=5 // pred_check_branch
        %150 = sbr.rel (%p147) target = $region12
      $region11: #{_lambda_.1} parent=5 // pred_region
        %s151 = ssub.s32 %s17, 1
        // Predicated region
        $region13: #{_lambda_.1} parent=11 // pred_check
          %p152 = pneg %p64
        $region14: #{_lambda_.1} parent=11 // pred_check_branch
          %154 = sbr.rel (%p152) target = $region16
        $region15: #{_lambda_.1} parent=11 // pred_region
          _
        $region16: #{_lambda_.1} parent=11 // pred_fallthru
          _
        // Predicated region
        $region17: #{_lambda_.1} parent=11 // pred_check
          %p155 = pneg %p85
        $region18: #{_lambda_.1} parent=11 // pred_check_branch
          %157 = sbr.rel (%p155) target = $region20
        $region19: #{_lambda_.1} parent=11 // pred_region
          _
        $region20: #{_lambda_.1} parent=11 // pred_fallthru
          _
      $region12: #{_lambda_.1} parent=5 // pred_fallthru
        _
      %p158 = scmp.lt.s32.totalorder %s17, 4
      // Predicated region
      $region21: #{_lambda_.1} parent=5 // pred_check
        %p159 = pneg %p158
      $region22: #{_lambda_.1} parent=5 // pred_check_branch
        %161 = sbr.rel (%p159) target = $region24
      $region23: #{_lambda_.1} parent=5 // pred_region
        // Predicated region
        $region25: #{_lambda_.1} parent=23 // pred_check
          %p162 = pneg %p37
        $region26: #{_lambda_.1} parent=23 // pred_check_branch
          %164 = sbr.rel (%p162) target = $region28
        $region27: #{_lambda_.1} parent=23 // pred_region
          %s165 = smul.u32 64, %s17
          %p166 = scmp.lt.s32.totalorder %s165, 255
          %s167 = scalar_select %p166, %s165, 255
          %s168 = smul.addr %s167, 8
          %s169 = scalar_lea.vmem %s0, %s168
          %s170 = smul.u32 64, %s17
        $region28: #{_lambda_.1} parent=23 // pred_fallthru
          _
      $region24: #{_lambda_.1} parent=5 // pred_fallthru
        _
      %p171 = scmp.le.s32.totalorder 1, %s17
      %p172 = scmp.lt.s32.totalorder %s17, 5
      %p173 = pnand %p171, %p172
      %p174 = pneg %p173
      // Predicated region
      $region29: #{_lambda_.1} parent=5 // pred_check
        _
      $region30: #{_lambda_.1} parent=5 // pred_check_branch
        %176 = sbr.rel (%p173) target = $region32
      $region31: #{_lambda_.1} parent=5 // pred_region
        %s177 = ssub.s32 %s17, 1
        %s178 = smul.u32 64, %s22
        %p179 = scmp.lt.s32.totalorder %s178, 255
        %s180 = scalar_select %p179, %s178, 255
        %s181 = smul.addr %s180, 8
        %s182 = scalar_lea.vmem %s0, %s181
        %p183 = pneg %p43
        %p184 = pneg %p40
        %p185 = pneg %p64
        %p186 = pneg %p61
        %p187 = pneg %p85
        %p188 = pneg %p82
        %p189 = pneg %p111
        %p190 = pneg %p108
        %s191 = sand.u32 %s98, 1
        %s192 = scalar_lea.sflag [#allocation3], %s191
        %s193 = sand.u32 %s98, 1
        %s194 = smul.addr %s193, 256
        %s195 = scalar_lea.vmem [#allocation2], %s194
        %p196 = pneg %p137
        %p197 = pneg %p134
        %s198 = sand.u32 %s124, 1
        %s199 = scalar_lea.sflag [#allocation5], %s198
        %s200 = sand.u32 %s124, 1
        %s201 = smul.addr %s200, 256
        %s202 = scalar_lea.vmem [#allocation4], %s201
        %s203 = smul.u32 64, %s22
        %p204 = scmp.lt.s32.totalorder %s203, 255
        %s205 = scalar_select %p204, %s203, 255
        %s206 = smul.addr %s205, 8
        %s207 = scalar_lea.vmem %s0, %s206
        %s208 = smul.u32 64, %s22
        %s209 = smul.u32 64, %s22
        %s210 = smul.u32 64, %s22
        %v211 = vld [vmem:[%s207] sm:$0xff]
        %v212 = vld [vmem:[%s207 + $0x8] sm:$0xff]
        %v213 = vld [vmem:[%s207 + $0x10] sm:$0xff]
        %v214 = vld [vmem:[%s207 + $0x18] sm:$0xff]
        %v215 = vld [vmem:[%s207 + $0x20] sm:$0xff]
        %v216 = vld [vmem:[%s207 + $0x28] sm:$0xff]
        %v217 = vld [vmem:[%s207 + $0x30] sm:$0xff]
        %v218 = vld [vmem:[%s207 + $0x38] sm:$0xff]
        %v219 = vld [vmem:[%s207 + $0x40] sm:$0xff]
        %v220 = vld [vmem:[%s207 + $0x48] sm:$0xff]
        %v221 = vld [vmem:[%s207 + $0x50] sm:$0xff]
        %v222 = vld [vmem:[%s207 + $0x58] sm:$0xff]
        %v223 = vld [vmem:[%s207 + $0x60] sm:$0xff]
        %v224 = vld [vmem:[%s207 + $0x68] sm:$0xff]
        %v225 = vld [vmem:[%s207 + $0x70] sm:$0xff]
        %v226 = vld [vmem:[%s207 + $0x78] sm:$0xff]
        %v227 = vld [vmem:[%s207 + $0x80] sm:$0xff]
        %v228 = vld [vmem:[%s207 + $0x88] sm:$0xff]
        %v229 = vld [vmem:[%s207 + $0x90] sm:$0xff]
        %v230 = vld [vmem:[%s207 + $0x98] sm:$0xff]
        %v231 = vld [vmem:[%s207 + $0xa0] sm:$0xff]
        %v232 = vld [vmem:[%s207 + $0xa8] sm:$0xff]
        %v233 = vld [vmem:[%s207 + $0xb0] sm:$0xff]
        %v234 = vld [vmem:[%s207 + $0xb8] sm:$0xff]
        %v235 = vld [vmem:[%s207 + $0xc0] sm:$0xff]
        %v236 = vld [vmem:[%s207 + $0xc8] sm:$0xff]
        %v237 = vld [vmem:[%s207 + $0xd0] sm:$0xff]
        %v238 = vld [vmem:[%s207 + $0xd8] sm:$0xff]
        %v239 = vld [vmem:[%s207 + $0xe0] sm:$0xff]
        %v240 = vld [vmem:[%s207 + $0xe8] sm:$0xff]
        %v241 = vld [vmem:[%s207 + $0xf0] sm:$0xff]
        %v242 = vld [vmem:[%s207 + $0xf8] sm:$0xff]
        %v243 = vld [vmem:[%s207 + $0x100] sm:$0xff]
        %v244 = vld [vmem:[%s207 + $0x108] sm:$0xff]
        %v245 = vld [vmem:[%s207 + $0x110] sm:$0xff]
        %v246 = vld [vmem:[%s207 + $0x118] sm:$0xff]
        %v247 = vld [vmem:[%s207 + $0x120] sm:$0xff]
        %v248 = vld [vmem:[%s207 + $0x128] sm:$0xff]
        %v249 = vld [vmem:[%s207 + $0x130] sm:$0xff]
        %v250 = vld [vmem:[%s207 + $0x138] sm:$0xff]
        %v251 = vld [vmem:[%s207 + $0x140] sm:$0xff]
        %v252 = vld [vmem:[%s207 + $0x148] sm:$0xff]
        %v253 = vld [vmem:[%s207 + $0x150] sm:$0xff]
        %v254 = vld [vmem:[%s207 + $0x158] sm:$0xff]
        %v255 = vld [vmem:[%s207 + $0x160] sm:$0xff]
        %v256 = vld [vmem:[%s207 + $0x168] sm:$0xff]
        %v257 = vld [vmem:[%s207 + $0x170] sm:$0xff]
        %v258 = vld [vmem:[%s207 + $0x178] sm:$0xff]
        %v259 = vld [vmem:[%s207 + $0x180] sm:$0xff]
        %v260 = vld [vmem:[%s207 + $0x188] sm:$0xff]
        %v261 = vld [vmem:[%s207 + $0x190] sm:$0xff]
        %v262 = vld [vmem:[%s207 + $0x198] sm:$0xff]
        %v263 = vld [vmem:[%s207 + $0x1a0] sm:$0xff]
        %v264 = vld [vmem:[%s207 + $0x1a8] sm:$0xff]
        %v265 = vld [vmem:[%s207 + $0x1b0] sm:$0xff]
        %v266 = vld [vmem:[%s207 + $0x1b8] sm:$0xff]
        %v267 = vld [vmem:[%s207 + $0x1c0] sm:$0xff]
        %v268 = vld [vmem:[%s207 + $0x1c8] sm:$0xff]
        %v269 = vld [vmem:[%s207 + $0x1d0] sm:$0xff]
        %v270 = vld [vmem:[%s207 + $0x1d8] sm:$0xff]
        %v271 = vld [vmem:[%s207 + $0x1e0] sm:$0xff]
        %v272 = vld [vmem:[%s207 + $0x1e8] sm:$0xff]
        %v273 = vld [vmem:[%s207 + $0x1f0] sm:$0xff]
        %v274 = vld [vmem:[%s207 + $0x1f8] sm:$0xff]
        %v275 = vld [vmem:[%s1] sm:$0xf]
        %v276 = vld [vmem:[%s1 + $0x4] sm:$0xf]
        %v277 = vld [vmem:[%s1 + $0x8] sm:$0xf]
        %v278 = vld [vmem:[%s1 + $0xc] sm:$0xf]
        %v279 = vld [vmem:[%s1 + $0x10] sm:$0xf]
        %v280 = vld [vmem:[%s1 + $0x14] sm:$0xf]
        %v281 = vld [vmem:[%s1 + $0x18] sm:$0xf]
        %v282 = vld [vmem:[%s1 + $0x1c] sm:$0xf]
        %v283 = vld [vmem:[%s1 + $0x20] sm:$0xf]
        %v284 = vld [vmem:[%s1 + $0x24] sm:$0xf]
        %v285 = vld [vmem:[%s1 + $0x28] sm:$0xf]
        %v286 = vld [vmem:[%s1 + $0x2c] sm:$0xf]
        %v287 = vld [vmem:[%s1 + $0x30] sm:$0xf]
        %v288 = vld [vmem:[%s1 + $0x34] sm:$0xf]
        %v289 = vld [vmem:[%s1 + $0x38] sm:$0xf]
        %v290 = vld [vmem:[%s1 + $0x3c] sm:$0xf]
        %v291 = vld [vmem:[%s2] sm:$0x1]
        %v292 = vpack.c.bf16 %v211, %v211
        %v293 = vpack.c.bf16 %v212, %v212
        %v294 = vpack.c.bf16 %v213, %v213
        %v295 = vpack.c.bf16 %v214, %v214
        %v296 = vpack.c.bf16 %v215, %v215
        %v297 = vpack.c.bf16 %v216, %v216
        %v298 = vpack.c.bf16 %v217, %v217
        %v299 = vpack.c.bf16 %v218, %v218
        %v300 = vpack.c.bf16 %v219, %v219
        %v301 = vpack.c.bf16 %v220, %v220
        %v302 = vpack.c.bf16 %v221, %v221
        %v303 = vpack.c.bf16 %v222, %v222
        %v304 = vpack.c.bf16 %v223, %v223
        %v305 = vpack.c.bf16 %v224, %v224
        %v306 = vpack.c.bf16 %v225, %v225
        %v307 = vpack.c.bf16 %v226, %v226
        %v308 = vpack.c.bf16 %v227, %v227
        %v309 = vpack.c.bf16 %v228, %v228
        %v310 = vpack.c.bf16 %v229, %v229
        %v311 = vpack.c.bf16 %v230, %v230
        %v312 = vpack.c.bf16 %v231, %v231
        %v313 = vpack.c.bf16 %v232, %v232
        %v314 = vpack.c.bf16 %v233, %v233
        %v315 = vpack.c.bf16 %v234, %v234
        %v316 = vpack.c.bf16 %v235, %v235
        %v317 = vpack.c.bf16 %v236, %v236
        %v318 = vpack.c.bf16 %v237, %v237
        %v319 = vpack.c.bf16 %v238, %v238
        %v320 = vpack.c.bf16 %v239, %v239
        %v321 = vpack.c.bf16 %v240, %v240
        %v322 = vpack.c.bf16 %v241, %v241
        %v323 = vpack.c.bf16 %v242, %v242
        %v324 = vpack.c.bf16 %v243, %v243
        %v325 = vpack.c.bf16 %v244, %v244
        %v326 = vpack.c.bf16 %v245, %v245
        %v327 = vpack.c.bf16 %v246, %v246
        %v328 = vpack.c.bf16 %v247, %v247
        %v329 = vpack.c.bf16 %v248, %v248
        %v330 = vpack.c.bf16 %v249, %v249
        %v331 = vpack.c.bf16 %v250, %v250
        %v332 = vpack.c.bf16 %v251, %v251
        %v333 = vpack.c.bf16 %v252, %v252
        %v334 = vpack.c.bf16 %v253, %v253
        %v335 = vpack.c.bf16 %v254, %v254
        %v336 = vpack.c.bf16 %v255, %v255
        %v337 = vpack.c.bf16 %v256, %v256
        %v338 = vpack.c.bf16 %v257, %v257
        %v339 = vpack.c.bf16 %v258, %v258
        %v340 = vpack.c.bf16 %v259, %v259
        %v341 = vpack.c.bf16 %v260, %v260
        %v342 = vpack.c.bf16 %v261, %v261
        %v343 = vpack.c.bf16 %v262, %v262
        %v344 = vpack.c.bf16 %v263, %v263
        %v345 = vpack.c.bf16 %v264, %v264
        %v346 = vpack.c.bf16 %v265, %v265
        %v347 = vpack.c.bf16 %v266, %v266
        %v348 = vpack.c.bf16 %v267, %v267
        %v349 = vpack.c.bf16 %v268, %v268
        %v350 = vpack.c.bf16 %v269, %v269
        %v351 = vpack.c.bf16 %v270, %v270
        %v352 = vpack.c.bf16 %v271, %v271
        %v353 = vpack.c.bf16 %v272, %v272
        %v354 = vpack.c.bf16 %v273, %v273
        %v355 = vpack.c.bf16 %v274, %v274
        %v357 = vperm.slane %v291, 0
        %v423 = vunpack.c.l.b16 %v292
        %v424 = vunpack.c.l.b16 %v293
        %v425 = vunpack.c.l.b16 %v294
        %v426 = vunpack.c.l.b16 %v295
        %v427 = vunpack.c.l.b16 %v296
        %v428 = vunpack.c.l.b16 %v297
        %v429 = vunpack.c.l.b16 %v298
        %v430 = vunpack.c.l.b16 %v299
        %v431 = vunpack.c.l.b16 %v300
        %v432 = vunpack.c.l.b16 %v301
        %v433 = vunpack.c.l.b16 %v302
        %v434 = vunpack.c.l.b16 %v303
        %v435 = vunpack.c.l.b16 %v304
        %v436 = vunpack.c.l.b16 %v305
        %v437 = vunpack.c.l.b16 %v306
        %v438 = vunpack.c.l.b16 %v307
        %v439 = vunpack.c.l.b16 %v308
        %v440 = vunpack.c.l.b16 %v309
        %v441 = vunpack.c.l.b16 %v310
        %v442 = vunpack.c.l.b16 %v311
        %v443 = vunpack.c.l.b16 %v312
        %v444 = vunpack.c.l.b16 %v313
        %v445 = vunpack.c.l.b16 %v314
        %v446 = vunpack.c.l.b16 %v315
        %v447 = vunpack.c.l.b16 %v316
        %v448 = vunpack.c.l.b16 %v317
        %v449 = vunpack.c.l.b16 %v318
        %v450 = vunpack.c.l.b16 %v319
        %v451 = vunpack.c.l.b16 %v320
        %v452 = vunpack.c.l.b16 %v321
        %v453 = vunpack.c.l.b16 %v322
        %v454 = vunpack.c.l.b16 %v323
        %v455 = vunpack.c.l.b16 %v324
        %v456 = vunpack.c.l.b16 %v325
        %v457 = vunpack.c.l.b16 %v326
        %v458 = vunpack.c.l.b16 %v327
        %v459 = vunpack.c.l.b16 %v328
        %v460 = vunpack.c.l.b16 %v329
        %v461 = vunpack.c.l.b16 %v330
        %v462 = vunpack.c.l.b16 %v331
        %v463 = vunpack.c.l.b16 %v332
        %v464 = vunpack.c.l.b16 %v333
        %v465 = vunpack.c.l.b16 %v334
        %v466 = vunpack.c.l.b16 %v335
        %v467 = vunpack.c.l.b16 %v336
        %v468 = vunpack.c.l.b16 %v337
        %v469 = vunpack.c.l.b16 %v338
        %v470 = vunpack.c.l.b16 %v339
        %v471 = vunpack.c.l.b16 %v340
        %v472 = vunpack.c.l.b16 %v341
        %v473 = vunpack.c.l.b16 %v342
        %v474 = vunpack.c.l.b16 %v343
        %v475 = vunpack.c.l.b16 %v344
        %v476 = vunpack.c.l.b16 %v345
        %v477 = vunpack.c.l.b16 %v346
        %v478 = vunpack.c.l.b16 %v347
        %v479 = vunpack.c.l.b16 %v348
        %v480 = vunpack.c.l.b16 %v349
        %v481 = vunpack.c.l.b16 %v350
        %v482 = vunpack.c.l.b16 %v351
        %v483 = vunpack.c.l.b16 %v352
        %v484 = vunpack.c.l.b16 %v353
        %v485 = vunpack.c.l.b16 %v354
        %v486 = vunpack.c.l.b16 %v355
        %v487 = vpack.c.b16 %v424, %v423
        %v488 = vpack.c.b16 %v426, %v425
        %v489 = vpack.c.b16 %v428, %v427
        %v490 = vpack.c.b16 %v430, %v429
        %v491 = vpack.c.b16 %v432, %v431
        %v492 = vpack.c.b16 %v434, %v433
        %v493 = vpack.c.b16 %v436, %v435
        %v494 = vpack.c.b16 %v438, %v437
        %v495 = vpack.c.b16 %v440, %v439
        %v496 = vpack.c.b16 %v442, %v441
        %v497 = vpack.c.b16 %v444, %v443
        %v498 = vpack.c.b16 %v446, %v445
        %v499 = vpack.c.b16 %v448, %v447
        %v500 = vpack.c.b16 %v450, %v449
        %v501 = vpack.c.b16 %v452, %v451
        %v502 = vpack.c.b16 %v454, %v453
        %v503 = vpack.c.b16 %v456, %v455
        %v504 = vpack.c.b16 %v458, %v457
        %v505 = vpack.c.b16 %v460, %v459
        %v506 = vpack.c.b16 %v462, %v461
        %v507 = vpack.c.b16 %v464, %v463
        %v508 = vpack.c.b16 %v466, %v465
        %v509 = vpack.c.b16 %v468, %v467
        %v510 = vpack.c.b16 %v470, %v469
        %v511 = vpack.c.b16 %v472, %v471
        %v512 = vpack.c.b16 %v474, %v473
        %v513 = vpack.c.b16 %v476, %v475
        %v514 = vpack.c.b16 %v478, %v477
        %v515 = vpack.c.b16 %v480, %v479
        %v516 = vpack.c.b16 %v482, %v481
        %v517 = vpack.c.b16 %v484, %v483
        %v518 = vpack.c.b16 %v486, %v485
        %v567 = vunpack.c.l.b16 %v275
        %v568 = vunpack.c.l.b16 %v276
        %v569 = vunpack.c.l.b16 %v277
        %v570 = vunpack.c.l.b16 %v278
        %v571 = vunpack.c.l.b16 %v279
        %v572 = vunpack.c.l.b16 %v280
        %v573 = vunpack.c.l.b16 %v281
        %v574 = vunpack.c.l.b16 %v282
        %v575 = vunpack.c.l.b16 %v283
        %v576 = vunpack.c.l.b16 %v284
        %v577 = vunpack.c.l.b16 %v285
        %v578 = vunpack.c.l.b16 %v286
        %v579 = vunpack.c.l.b16 %v287
        %v580 = vunpack.c.l.b16 %v288
        %v581 = vunpack.c.l.b16 %v289
        %v582 = vunpack.c.l.b16 %v290
        %v583 = vpack.c.b16 %v568, %v567
        %v584 = vpack.c.b16 %v570, %v569
        %v585 = vpack.c.b16 %v572, %v571
        %v586 = vpack.c.b16 %v574, %v573
        %v587 = vpack.c.b16 %v576, %v575
        %v588 = vpack.c.b16 %v578, %v577
        %v589 = vpack.c.b16 %v580, %v579
        %v590 = vpack.c.b16 %v582, %v581
        %599 = vmatpush.bf16.msra.mxu0 %v590
        %600 = vmatpush.bf16.msra.mxu0 %v589
        %601 = vmatpush.bf16.msra.mxu0 %v588
        %602 = vmatpush.bf16.msra.mxu0 %v587
        %603 = vmatpush.bf16.msra.mxu0 %v586
        %604 = vmatpush.bf16.msra.mxu0 %v585
        %605 = vmatpush.bf16.msra.mxu0 %v584
        %606 = vmatpush.bf16.msra.mxu0 %v583
        %607 = vmatmul.bf16.gmra.mxu0 %v487
        %v608 = vpop.f32.mrf.mxu0
        %v609 = vadd.f32 %v357, %v608
        %v610 = vpop.f32.mrf.mxu0
        %v611 = vadd.f32 %v357, %v610
        %612 = vmatmul.bf16.gmra.mxu0 %v488
        %v613 = vpop.f32.mrf.mxu0
        %v614 = vadd.f32 %v357, %v613
        %v615 = vpop.f32.mrf.mxu0
        %v616 = vadd.f32 %v357, %v615
        %617 = vmatmul.bf16.gmra.mxu0 %v489
        %v618 = vpop.f32.mrf.mxu0
        %v619 = vadd.f32 %v357, %v618
        %v620 = vpop.f32.mrf.mxu0
        %v621 = vadd.f32 %v357, %v620
        %622 = vmatmul.bf16.gmra.mxu0 %v490
        %v623 = vpop.f32.mrf.mxu0
        %v624 = vadd.f32 %v357, %v623
        %v625 = vpop.f32.mrf.mxu0
        %v626 = vadd.f32 %v357, %v625
        %627 = vmatmul.bf16.gmra.mxu0 %v491
        %v628 = vpop.f32.mrf.mxu0
        %v629 = vadd.f32 %v357, %v628
        %v630 = vpop.f32.mrf.mxu0
        %v631 = vadd.f32 %v357, %v630
        %632 = vmatmul.bf16.gmra.mxu0 %v492
        %v633 = vpop.f32.mrf.mxu0
        %v634 = vadd.f32 %v357, %v633
        %v635 = vpop.f32.mrf.mxu0
        %v636 = vadd.f32 %v357, %v635
        %637 = vmatmul.bf16.gmra.mxu0 %v493
        %v638 = vpop.f32.mrf.mxu0
        %v639 = vadd.f32 %v357, %v638
        %v640 = vpop.f32.mrf.mxu0
        %v641 = vadd.f32 %v357, %v640
        %642 = vmatmul.bf16.gmra.mxu0 %v494
        %v643 = vpop.f32.mrf.mxu0
        %v644 = vadd.f32 %v357, %v643
        %v645 = vpop.f32.mrf.mxu0
        %v646 = vadd.f32 %v357, %v645
        %647 = vmatmul.bf16.gmra.mxu0 %v495
        %v648 = vpop.f32.mrf.mxu0
        %v649 = vadd.f32 %v357, %v648
        %v650 = vpop.f32.mrf.mxu0
        %v651 = vadd.f32 %v357, %v650
        %652 = vmatmul.bf16.gmra.mxu0 %v496
        %v653 = vpop.f32.mrf.mxu0
        %v654 = vadd.f32 %v357, %v653
        %v655 = vpop.f32.mrf.mxu0
        %v656 = vadd.f32 %v357, %v655
        %657 = vmatmul.bf16.gmra.mxu0 %v497
        %v658 = vpop.f32.mrf.mxu0
        %v659 = vadd.f32 %v357, %v658
        %v660 = vpop.f32.mrf.mxu0
        %v661 = vadd.f32 %v357, %v660
        %662 = vmatmul.bf16.gmra.mxu0 %v498
        %v663 = vpop.f32.mrf.mxu0
        %v664 = vadd.f32 %v357, %v663
        %v665 = vpop.f32.mrf.mxu0
        %v666 = vadd.f32 %v357, %v665
        %667 = vmatmul.bf16.gmra.mxu0 %v499
        %v668 = vpop.f32.mrf.mxu0
        %v669 = vadd.f32 %v357, %v668
        %v670 = vpop.f32.mrf.mxu0
        %v671 = vadd.f32 %v357, %v670
        %672 = vmatmul.bf16.gmra.mxu0 %v500
        %v673 = vpop.f32.mrf.mxu0
        %v674 = vadd.f32 %v357, %v673
        %v675 = vpop.f32.mrf.mxu0
        %v676 = vadd.f32 %v357, %v675
        %677 = vmatmul.bf16.gmra.mxu0 %v501
        %v678 = vpop.f32.mrf.mxu0
        %v679 = vadd.f32 %v357, %v678
        %v680 = vpop.f32.mrf.mxu0
        %v681 = vadd.f32 %v357, %v680
        %682 = vmatmul.bf16.gmra.mxu0 %v502
        %v683 = vpop.f32.mrf.mxu0
        %v684 = vadd.f32 %v357, %v683
        %v685 = vpop.f32.mrf.mxu0
        %v686 = vadd.f32 %v357, %v685
        %687 = vmatmul.bf16.gmra.mxu0 %v503
        %v688 = vpop.f32.mrf.mxu0
        %v689 = vadd.f32 %v357, %v688
        %v690 = vpop.f32.mrf.mxu0
        %v691 = vadd.f32 %v357, %v690
        %692 = vmatmul.bf16.gmra.mxu0 %v504
        %v693 = vpop.f32.mrf.mxu0
        %v694 = vadd.f32 %v357, %v693
        %v695 = vpop.f32.mrf.mxu0
        %v696 = vadd.f32 %v357, %v695
        %697 = vmatmul.bf16.gmra.mxu0 %v505
        %v698 = vpop.f32.mrf.mxu0
        %v699 = vadd.f32 %v357, %v698
        %v700 = vpop.f32.mrf.mxu0
        %v701 = vadd.f32 %v357, %v700
        %702 = vmatmul.bf16.gmra.mxu0 %v506
        %v703 = vpop.f32.mrf.mxu0
        %v704 = vadd.f32 %v357, %v703
        %v705 = vpop.f32.mrf.mxu0
        %v706 = vadd.f32 %v357, %v705
        %707 = vmatmul.bf16.gmra.mxu0 %v507
        %v708 = vpop.f32.mrf.mxu0
        %v709 = vadd.f32 %v357, %v708
        %v710 = vpop.f32.mrf.mxu0
        %v711 = vadd.f32 %v357, %v710
        %712 = vmatmul.bf16.gmra.mxu0 %v508
        %v713 = vpop.f32.mrf.mxu0
        %v714 = vadd.f32 %v357, %v713
        %v715 = vpop.f32.mrf.mxu0
        %v716 = vadd.f32 %v357, %v715
        %717 = vmatmul.bf16.gmra.mxu0 %v509
        %v718 = vpop.f32.mrf.mxu0
        %v719 = vadd.f32 %v357, %v718
        %v720 = vpop.f32.mrf.mxu0
        %v721 = vadd.f32 %v357, %v720
        %722 = vmatmul.bf16.gmra.mxu0 %v510
        %v723 = vpop.f32.mrf.mxu0
        %v724 = vadd.f32 %v357, %v723
        %v725 = vpop.f32.mrf.mxu0
        %v726 = vadd.f32 %v357, %v725
        %727 = vmatmul.bf16.gmra.mxu0 %v511
        %v728 = vpop.f32.mrf.mxu0
        %v729 = vadd.f32 %v357, %v728
        %v730 = vpop.f32.mrf.mxu0
        %v731 = vadd.f32 %v357, %v730
        %732 = vmatmul.bf16.gmra.mxu0 %v512
        %v733 = vpop.f32.mrf.mxu0
        %v734 = vadd.f32 %v357, %v733
        %v735 = vpop.f32.mrf.mxu0
        %v736 = vadd.f32 %v357, %v735
        %737 = vmatmul.bf16.gmra.mxu0 %v513
        %v738 = vpop.f32.mrf.mxu0
        %v739 = vadd.f32 %v357, %v738
        %v740 = vpop.f32.mrf.mxu0
        %v741 = vadd.f32 %v357, %v740
        %742 = vmatmul.bf16.gmra.mxu0 %v514
        %v743 = vpop.f32.mrf.mxu0
        %v744 = vadd.f32 %v357, %v743
        %v745 = vpop.f32.mrf.mxu0
        %v746 = vadd.f32 %v357, %v745
        %747 = vmatmul.bf16.gmra.mxu0 %v515
        %v748 = vpop.f32.mrf.mxu0
        %v749 = vadd.f32 %v357, %v748
        %v750 = vpop.f32.mrf.mxu0
        %v751 = vadd.f32 %v357, %v750
        %752 = vmatmul.bf16.gmra.mxu0 %v516
        %v753 = vpop.f32.mrf.mxu0
        %v754 = vadd.f32 %v357, %v753
        %v755 = vpop.f32.mrf.mxu0
        %v756 = vadd.f32 %v357, %v755
        %757 = vmatmul.bf16.gmra.mxu0 %v517
        %v758 = vpop.f32.mrf.mxu0
        %v759 = vadd.f32 %v357, %v758
        %v760 = vpop.f32.mrf.mxu0
        %v761 = vadd.f32 %v357, %v760
        %762 = vmatmul.bf16.gmra.mxu0 %v518
        %v763 = vpop.f32.mrf.mxu0
        %v764 = vadd.f32 %v357, %v763
        %v765 = vpop.f32.mrf.mxu0
        %v766 = vadd.f32 %v357, %v765
        %767 = vdwg.mxu0
        %v768 = vpack.c.bf16 %v609, %v609
        %v769 = vpack.c.bf16 %v611, %v611
        %v770 = vpack.c.bf16 %v614, %v614
        %v771 = vpack.c.bf16 %v616, %v616
        %v772 = vpack.c.bf16 %v619, %v619
        %v773 = vpack.c.bf16 %v621, %v621
        %v774 = vpack.c.bf16 %v624, %v624
        %v775 = vpack.c.bf16 %v626, %v626
        %v776 = vpack.c.bf16 %v629, %v629
        %v777 = vpack.c.bf16 %v631, %v631
        %v778 = vpack.c.bf16 %v634, %v634
        %v779 = vpack.c.bf16 %v636, %v636
        %v780 = vpack.c.bf16 %v639, %v639
        %v781 = vpack.c.bf16 %v641, %v641
        %v782 = vpack.c.bf16 %v644, %v644
        %v783 = vpack.c.bf16 %v646, %v646
        %v784 = vpack.c.bf16 %v649, %v649
        %v785 = vpack.c.bf16 %v651, %v651
        %v786 = vpack.c.bf16 %v654, %v654
        %v787 = vpack.c.bf16 %v656, %v656
        %v788 = vpack.c.bf16 %v659, %v659
        %v789 = vpack.c.bf16 %v661, %v661
        %v790 = vpack.c.bf16 %v664, %v664
        %v791 = vpack.c.bf16 %v666, %v666
        %v792 = vpack.c.bf16 %v669, %v669
        %v793 = vpack.c.bf16 %v671, %v671
        %v794 = vpack.c.bf16 %v674, %v674
        %v795 = vpack.c.bf16 %v676, %v676
        %v796 = vpack.c.bf16 %v679, %v679
        %v797 = vpack.c.bf16 %v681, %v681
        %v798 = vpack.c.bf16 %v684, %v684
        %v799 = vpack.c.bf16 %v686, %v686
        %v800 = vpack.c.bf16 %v689, %v689
        %v801 = vpack.c.bf16 %v691, %v691
        %v802 = vpack.c.bf16 %v694, %v694
        %v803 = vpack.c.bf16 %v696, %v696
        %v804 = vpack.c.bf16 %v699, %v699
        %v805 = vpack.c.bf16 %v701, %v701
        %v806 = vpack.c.bf16 %v704, %v704
        %v807 = vpack.c.bf16 %v706, %v706
        %v808 = vpack.c.bf16 %v709, %v709
        %v809 = vpack.c.bf16 %v711, %v711
        %v810 = vpack.c.bf16 %v714, %v714
        %v811 = vpack.c.bf16 %v716, %v716
        %v812 = vpack.c.bf16 %v719, %v719
        %v813 = vpack.c.bf16 %v721, %v721
        %v814 = vpack.c.bf16 %v724, %v724
        %v815 = vpack.c.bf16 %v726, %v726
        %v816 = vpack.c.bf16 %v729, %v729
        %v817 = vpack.c.bf16 %v731, %v731
        %v818 = vpack.c.bf16 %v734, %v734
        %v819 = vpack.c.bf16 %v736, %v736
        %v820 = vpack.c.bf16 %v739, %v739
        %v821 = vpack.c.bf16 %v741, %v741
        %v822 = vpack.c.bf16 %v744, %v744
        %v823 = vpack.c.bf16 %v746, %v746
        %v824 = vpack.c.bf16 %v749, %v749
        %v825 = vpack.c.bf16 %v751, %v751
        %v826 = vpack.c.bf16 %v754, %v754
        %v827 = vpack.c.bf16 %v756, %v756
        %v828 = vpack.c.bf16 %v759, %v759
        %v829 = vpack.c.bf16 %v761, %v761
        %v830 = vpack.c.bf16 %v764, %v764
        %v831 = vpack.c.bf16 %v766, %v766
        %832 = vst [vmem:[%s195] sm:$0xf] %v292
        %833 = vst [vmem:[%s195 + $0x4] sm:$0xf] %v293
        %834 = vst [vmem:[%s195 + $0x8] sm:$0xf] %v294
        %835 = vst [vmem:[%s195 + $0xc] sm:$0xf] %v295
        %836 = vst [vmem:[%s195 + $0x10] sm:$0xf] %v296
        %837 = vst [vmem:[%s195 + $0x14] sm:$0xf] %v297
        %838 = vst [vmem:[%s195 + $0x18] sm:$0xf] %v298
        %839 = vst [vmem:[%s195 + $0x1c] sm:$0xf] %v299
        %840 = vst [vmem:[%s195 + $0x20] sm:$0xf] %v300
        %841 = vst [vmem:[%s195 + $0x24] sm:$0xf] %v301
        %842 = vst [vmem:[%s195 + $0x28] sm:$0xf] %v302
        %843 = vst [vmem:[%s195 + $0x2c] sm:$0xf] %v303
        %844 = vst [vmem:[%s195 + $0x30] sm:$0xf] %v304
        %845 = vst [vmem:[%s195 + $0x34] sm:$0xf] %v305
        %846 = vst [vmem:[%s195 + $0x38] sm:$0xf] %v306
        %847 = vst [vmem:[%s195 + $0x3c] sm:$0xf] %v307
        %848 = vst [vmem:[%s195 + $0x40] sm:$0xf] %v308
        %849 = vst [vmem:[%s195 + $0x44] sm:$0xf] %v309
        %850 = vst [vmem:[%s195 + $0x48] sm:$0xf] %v310
        %851 = vst [vmem:[%s195 + $0x4c] sm:$0xf] %v311
        %852 = vst [vmem:[%s195 + $0x50] sm:$0xf] %v312
        %853 = vst [vmem:[%s195 + $0x54] sm:$0xf] %v313
        %854 = vst [vmem:[%s195 + $0x58] sm:$0xf] %v314
        %855 = vst [vmem:[%s195 + $0x5c] sm:$0xf] %v315
        %856 = vst [vmem:[%s195 + $0x60] sm:$0xf] %v316
        %857 = vst [vmem:[%s195 + $0x64] sm:$0xf] %v317
        %858 = vst [vmem:[%s195 + $0x68] sm:$0xf] %v318
        %859 = vst [vmem:[%s195 + $0x6c] sm:$0xf] %v319
        %860 = vst [vmem:[%s195 + $0x70] sm:$0xf] %v320
        %861 = vst [vmem:[%s195 + $0x74] sm:$0xf] %v321
        %862 = vst [vmem:[%s195 + $0x78] sm:$0xf] %v322
        %863 = vst [vmem:[%s195 + $0x7c] sm:$0xf] %v323
        %864 = vst [vmem:[%s195 + $0x80] sm:$0xf] %v324
        %865 = vst [vmem:[%s195 + $0x84] sm:$0xf] %v325
        %866 = vst [vmem:[%s195 + $0x88] sm:$0xf] %v326
        %867 = vst [vmem:[%s195 + $0x8c] sm:$0xf] %v327
        %868 = vst [vmem:[%s195 + $0x90] sm:$0xf] %v328
        %869 = vst [vmem:[%s195 + $0x94] sm:$0xf] %v329
        %870 = vst [vmem:[%s195 + $0x98] sm:$0xf] %v330
        %871 = vst [vmem:[%s195 + $0x9c] sm:$0xf] %v331
        %872 = vst [vmem:[%s195 + $0xa0] sm:$0xf] %v332
        %873 = vst [vmem:[%s195 + $0xa4] sm:$0xf] %v333
        %874 = vst [vmem:[%s195 + $0xa8] sm:$0xf] %v334
        %875 = vst [vmem:[%s195 + $0xac] sm:$0xf] %v335
        %876 = vst [vmem:[%s195 + $0xb0] sm:$0xf] %v336
        %877 = vst [vmem:[%s195 + $0xb4] sm:$0xf] %v337
        %878 = vst [vmem:[%s195 + $0xb8] sm:$0xf] %v338
        %879 = vst [vmem:[%s195 + $0xbc] sm:$0xf] %v339
        %880 = vst [vmem:[%s195 + $0xc0] sm:$0xf] %v340
        %881 = vst [vmem:[%s195 + $0xc4] sm:$0xf] %v341
        %882 = vst [vmem:[%s195 + $0xc8] sm:$0xf] %v342
        %883 = vst [vmem:[%s195 + $0xcc] sm:$0xf] %v343
        %884 = vst [vmem:[%s195 + $0xd0] sm:$0xf] %v344
        %885 = vst [vmem:[%s195 + $0xd4] sm:$0xf] %v345
        %886 = vst [vmem:[%s195 + $0xd8] sm:$0xf] %v346
        %887 = vst [vmem:[%s195 + $0xdc] sm:$0xf] %v347
        %888 = vst [vmem:[%s195 + $0xe0] sm:$0xf] %v348
        %889 = vst [vmem:[%s195 + $0xe4] sm:$0xf] %v349
        %890 = vst [vmem:[%s195 + $0xe8] sm:$0xf] %v350
        %891 = vst [vmem:[%s195 + $0xec] sm:$0xf] %v351
        %892 = vst [vmem:[%s195 + $0xf0] sm:$0xf] %v352
        %893 = vst [vmem:[%s195 + $0xf4] sm:$0xf] %v353
        %894 = vst [vmem:[%s195 + $0xf8] sm:$0xf] %v354
        %895 = vst [vmem:[%s195 + $0xfc] sm:$0xf] %v355
        %896 = vst [vmem:[%s202] sm:$0xf] %v768
        %897 = vst [vmem:[%s202 + $0x4] sm:$0xf] %v769
        %898 = vst [vmem:[%s202 + $0x8] sm:$0xf] %v770
        %899 = vst [vmem:[%s202 + $0xc] sm:$0xf] %v771
        %900 = vst [vmem:[%s202 + $0x10] sm:$0xf] %v772
        %901 = vst [vmem:[%s202 + $0x14] sm:$0xf] %v773
        %902 = vst [vmem:[%s202 + $0x18] sm:$0xf] %v774
        %903 = vst [vmem:[%s202 + $0x1c] sm:$0xf] %v775
        %904 = vst [vmem:[%s202 + $0x20] sm:$0xf] %v776
        %905 = vst [vmem:[%s202 + $0x24] sm:$0xf] %v777
        %906 = vst [vmem:[%s202 + $0x28] sm:$0xf] %v778
        %907 = vst [vmem:[%s202 + $0x2c] sm:$0xf] %v779
        %908 = vst [vmem:[%s202 + $0x30] sm:$0xf] %v780
        %909 = vst [vmem:[%s202 + $0x34] sm:$0xf] %v781
        %910 = vst [vmem:[%s202 + $0x38] sm:$0xf] %v782
        %911 = vst [vmem:[%s202 + $0x3c] sm:$0xf] %v783
        %912 = vst [vmem:[%s202 + $0x40] sm:$0xf] %v784
        %913 = vst [vmem:[%s202 + $0x44] sm:$0xf] %v785
        %914 = vst [vmem:[%s202 + $0x48] sm:$0xf] %v786
        %915 = vst [vmem:[%s202 + $0x4c] sm:$0xf] %v787
        %916 = vst [vmem:[%s202 + $0x50] sm:$0xf] %v788
        %917 = vst [vmem:[%s202 + $0x54] sm:$0xf] %v789
        %918 = vst [vmem:[%s202 + $0x58] sm:$0xf] %v790
        %919 = vst [vmem:[%s202 + $0x5c] sm:$0xf] %v791
        %920 = vst [vmem:[%s202 + $0x60] sm:$0xf] %v792
        %921 = vst [vmem:[%s202 + $0x64] sm:$0xf] %v793
        %922 = vst [vmem:[%s202 + $0x68] sm:$0xf] %v794
        %923 = vst [vmem:[%s202 + $0x6c] sm:$0xf] %v795
        %924 = vst [vmem:[%s202 + $0x70] sm:$0xf] %v796
        %925 = vst [vmem:[%s202 + $0x74] sm:$0xf] %v797
        %926 = vst [vmem:[%s202 + $0x78] sm:$0xf] %v798
        %927 = vst [vmem:[%s202 + $0x7c] sm:$0xf] %v799
        %928 = vst [vmem:[%s202 + $0x80] sm:$0xf] %v800
        %929 = vst [vmem:[%s202 + $0x84] sm:$0xf] %v801
        %930 = vst [vmem:[%s202 + $0x88] sm:$0xf] %v802
        %931 = vst [vmem:[%s202 + $0x8c] sm:$0xf] %v803
        %932 = vst [vmem:[%s202 + $0x90] sm:$0xf] %v804
        %933 = vst [vmem:[%s202 + $0x94] sm:$0xf] %v805
        %934 = vst [vmem:[%s202 + $0x98] sm:$0xf] %v806
        %935 = vst [vmem:[%s202 + $0x9c] sm:$0xf] %v807
        %936 = vst [vmem:[%s202 + $0xa0] sm:$0xf] %v808
        %937 = vst [vmem:[%s202 + $0xa4] sm:$0xf] %v809
        %938 = vst [vmem:[%s202 + $0xa8] sm:$0xf] %v810
        %939 = vst [vmem:[%s202 + $0xac] sm:$0xf] %v811
        %940 = vst [vmem:[%s202 + $0xb0] sm:$0xf] %v812
        %941 = vst [vmem:[%s202 + $0xb4] sm:$0xf] %v813
        %942 = vst [vmem:[%s202 + $0xb8] sm:$0xf] %v814
        %943 = vst [vmem:[%s202 + $0xbc] sm:$0xf] %v815
        %944 = vst [vmem:[%s202 + $0xc0] sm:$0xf] %v816
        %945 = vst [vmem:[%s202 + $0xc4] sm:$0xf] %v817
        %946 = vst [vmem:[%s202 + $0xc8] sm:$0xf] %v818
        %947 = vst [vmem:[%s202 + $0xcc] sm:$0xf] %v819
        %948 = vst [vmem:[%s202 + $0xd0] sm:$0xf] %v820
        %949 = vst [vmem:[%s202 + $0xd4] sm:$0xf] %v821
        %950 = vst [vmem:[%s202 + $0xd8] sm:$0xf] %v822
        %951 = vst [vmem:[%s202 + $0xdc] sm:$0xf] %v823
        %952 = vst [vmem:[%s202 + $0xe0] sm:$0xf] %v824
        %953 = vst [vmem:[%s202 + $0xe4] sm:$0xf] %v825
        %954 = vst [vmem:[%s202 + $0xe8] sm:$0xf] %v826
        %955 = vst [vmem:[%s202 + $0xec] sm:$0xf] %v827
        %956 = vst [vmem:[%s202 + $0xf0] sm:$0xf] %v828
        %957 = vst [vmem:[%s202 + $0xf4] sm:$0xf] %v829
        %958 = vst [vmem:[%s202 + $0xf8] sm:$0xf] %v830
        %959 = vst [vmem:[%s202 + $0xfc] sm:$0xf] %v831
        %s960 = sand.u32 %s98, 1
        %s961 = scalar_lea.sflag [#allocation3], %s960
        %s962 = sand.u32 %s98, 1
        %s963 = smul.addr %s962, 256
        %s964 = scalar_lea.vmem [#allocation2], %s963
        %s965 = sand.u32 %s124, 1
        %s966 = scalar_lea.sflag [#allocation5], %s965
        %s967 = sand.u32 %s124, 1
        %s968 = smul.addr %s967, 256
        %s969 = scalar_lea.vmem [#allocation4], %s968
        // Predicated region
        $region33: #{_lambda_.1} parent=31 // pred_check
          %p970 = pneg %p108
        $region34: #{_lambda_.1} parent=31 // pred_check_branch
          %972 = sbr.rel (%p970) target = $region36
        $region35: #{_lambda_.1} parent=31 // pred_region
          %s973 = smul.u32 64, %s22
          %975 = vsyncadd %s961, 0
          %s976 = smul.addr %s973, 4
          %s977 = scalar_lea.hbm %s3, %s976
          %s978 = sshll.u32 %s964, 4
          %s979 = int_to_ptr.vmem [resolvable:$true] %s978
          %s980 = sshll.u32 %s977, 4
          %s981 = int_to_ptr.hbm [resolvable:$true] %s980
          %986 = dma.vmem_to_hbm [thread:$0]  %s979, 4096, %s981, %s961, 64, 64, 4
        $region36: #{_lambda_.1} parent=31 // pred_fallthru
          _
        // Predicated region
        $region37: #{_lambda_.1} parent=31 // pred_check
          %p987 = pneg %p134
        $region38: #{_lambda_.1} parent=31 // pred_check_branch
          %989 = sbr.rel (%p987) target = $region40
        $region39: #{_lambda_.1} parent=31 // pred_region
          %s990 = smul.u32 64, %s22
          %992 = vsyncadd %s966, 0
          %s993 = smul.addr %s990, 4
          %s994 = scalar_lea.hbm %s4, %s993
          %s995 = sshll.u32 %s969, 4
          %s996 = int_to_ptr.vmem [resolvable:$true] %s995
          %s997 = sshll.u32 %s994, 4
          %s998 = int_to_ptr.hbm [resolvable:$true] %s997
          %1003 = dma.vmem_to_hbm [thread:$0]  %s996, 4096, %s998, %s966, 64, 64, 4
        $region40: #{_lambda_.1} parent=31 // pred_fallthru
          _
      $region32: #{_lambda_.1} parent=5 // pred_fallthru
        _
      %p1004 = scmp.le.s32.totalorder 2, %s17
      // Predicated region
      $region41: #{_lambda_.1} parent=5 // pred_check
        %p1005 = pneg %p1004
      $region42: #{_lambda_.1} parent=5 // pred_check_branch
        %1007 = sbr.rel (%p1005) target = $region44
      $region43: #{_lambda_.1} parent=5 // pred_region
        %s1008 = ssub.s32 %s17, 2
        // Predicated region
        $region45: #{_lambda_.1} parent=43 // pred_check
          %p1009 = pneg %p114
        $region46: #{_lambda_.1} parent=43 // pred_check_branch
          %1011 = sbr.rel (%p1009) target = $region48
        $region47: #{_lambda_.1} parent=43 // pred_region
          %s1012 = sand.u32 %s99, 1
          %s1013 = scalar_lea.sflag [#allocation3], %s1012
          %s1014 = sand.u32 %s99, 1
          %s1015 = smul.addr %s1014, 256
          %s1016 = scalar_lea.vmem [#allocation2], %s1015
          %1018 = dma.done %s1013, 4096
        $region48: #{_lambda_.1} parent=43 // pred_fallthru
          _
        // Predicated region
        $region49: #{_lambda_.1} parent=43 // pred_check
          %p1019 = pneg %p140
        $region50: #{_lambda_.1} parent=43 // pred_check_branch
          %1021 = sbr.rel (%p1019) target = $region52
        $region51: #{_lambda_.1} parent=43 // pred_region
          %s1022 = sand.u32 %s125, 1
          %s1023 = scalar_lea.sflag [#allocation5], %s1022
          %s1024 = sand.u32 %s125, 1
          %s1025 = smul.addr %s1024, 256
          %s1026 = scalar_lea.vmem [#allocation4], %s1025
          %1028 = dma.done %s1023, 4096
        $region52: #{_lambda_.1} parent=43 // pred_fallthru
          _
      $region44: #{_lambda_.1} parent=5 // pred_fallthru
        _
    $region6: #{_lambda_.1} parent=1 // loop_footer
      %s21 = sadd.s32 1, %s17
    $region7: #{_lambda_.1} parent=1 // loop_footer_branch
      %16 = sbr.rel target = $region3
    $region8: #{_lambda_.1} parent=1 // loop_exit
      _
    %1029 = vsyncpa [#allocation3], 1
    %s1030 = scalar_lea.sflag [#allocation3], 1
    %1031 = vsyncpa %s1030, 1
    %1032 = vsyncpa [#allocation5], 1
    %s1033 = scalar_lea.sflag [#allocation5], 1
    %1034 = vsyncpa %s1033, 1

</llo_original>
